<compile_context>
chip_gen: v5e
topology: v5e:2x2
jax: 0.10.0
libtpu: 0.0.40
codegen_flags: <defaults>
</compile_context>

<pallas_src>
import numpy as np
import jax
import jax.numpy as jnp
from jax.experimental import pallas as pl
from jax.experimental.pallas import tpu as pltpu

_LANE = 128


def _round_up(x, m):
    return ((x + m - 1) // m) * m


# ---------------------------------------------------------------------------
# Hardware queries (safe fallbacks if unavailable)
# ---------------------------------------------------------------------------
def _vmem_capacity_bytes():
    try:
        info = pltpu.get_tpu_info()
        cap = int(getattr(info, "vmem_capacity_bytes", 0))
        if cap > 0:
            return cap
    except Exception:
        pass
    return 64 * 1024 * 1024  # conservative: v7x per-core VMEM


def _num_tensorcores():
    try:
        dev = jax.local_devices()[0]
        for attr in ("num_cores", "core_count"):
            v = getattr(dev, attr, None)
            if isinstance(v, int) and v > 0:
                return v
        if "v7" in str(getattr(dev, "device_kind", "")).lower():
            return 2
    except Exception:
        pass
    return 1


# ---------------------------------------------------------------------------
# Kernels: tiled matmul with K-accumulation (optionally fused composition)
# ---------------------------------------------------------------------------
def _matmul_kernel(x_ref, w_ref, o_ref, acc_ref):
    k = pl.program_id(2)

    @pl.when(k == 0)
    def _():
        acc_ref[...] = jnp.zeros_like(acc_ref)

    acc_ref[...] += jnp.dot(x_ref[...], w_ref[...],
                            preferred_element_type=jnp.float32)

    @pl.when(k == pl.num_programs(2) - 1)
    def _():
        o_ref[...] = acc_ref[...].astype(o_ref.dtype)


def _make_comp_matmul_kernel(mode):
    # (x op y_row) @ W with y_row a single relation row broadcast over the tile.
    def kernel(x_ref, y_ref, w_ref, o_ref, acc_ref):
        k = pl.program_id(2)

        @pl.when(k == 0)
        def _():
            acc_ref[...] = jnp.zeros_like(acc_ref)

        x = x_ref[...]
        y = y_ref[...]  # (1, TK) -> broadcasts over rows in-VMEM
        if mode == "add":
            c = x + y
        elif mode == "sub":
            c = x - y
        elif mode == "mult":
            c = x * y
        else:
            raise ValueError(f"unsupported composition mode: {mode}")
        acc_ref[...] += jnp.dot(c, w_ref[...],
                                preferred_element_type=jnp.float32)

        @pl.when(k == pl.num_programs(2) - 1)
        def _():
            o_ref[...] = acc_ref[...].astype(o_ref.dtype)

    return kernel


# ---------------------------------------------------------------------------
# Tile selection (generation-aware VMEM budget, MXU-aligned row tiles)
# ---------------------------------------------------------------------------
def _tile_candidates(dim, cap=2048):
    cap = min(dim, cap)
    cands = [t for t in range(_LANE, cap + 1, _LANE) if dim % t == 0]
    if not cands:
        cands = [dim]
    return sorted(cands, reverse=True)


def _select_tiles(M, K, Nout, *, has_y_row, out_bytes, vmem_cap, cores):
    # Scoped-VMEM target: ~0.72x physical (≈92 MiB on v5e/v6e, ≈46 MiB on v7x).
    vmem_limit = max(32 << 20, min(int(vmem_cap * 0.72), 100 << 20))
    budget = vmem_limit - (4 << 20)

    # Row tile: prefer 256 (MXU height on v6e/v7x); multiple of 8 otherwise.
    if M < 8:
        tm = M
    else:
        tm = min(256, (M // 8) * 8)
        if cores > 1 and M >= 16:
            # Ensure >=2 M grid steps so both TensorCores (v7x) get work.
            tm = min(tm, max(8, _round_up(-(-M // cores), 8)))

    def footprint(tm_, tn_, tk_):
        b = 2 * tm_ * tk_ * 2                 # x   bf16, double-buffered
        if has_y_row:
            b += 2 * 1 * tk_ * 2              # broadcast relation row (tiny)
        b += 2 * tk_ * tn_ * 2                # W   bf16, double-buffered
        b += 2 * tm_ * tn_ * out_bytes        # out, double-buffered
        b += tm_ * tn_ * 4                    # f32 accumulator scratch
        return b

    tn_cands = _tile_candidates(Nout)
    tk_cands = _tile_candidates(K)
    for tn in tn_cands:                       # large TN first: x streamed fewer times
        for tk in tk_cands:
            if footprint(tm, tn, tk) <= budget:
                return tm, tn, tk, vmem_limit
    tn, tk = tn_cands[-1], tk_cands[-1]
    while tm > 8 and footprint(tm, tn, tk) > budget:
        tm = max(8, ((tm // 2) // 8) * 8)
    return tm, tn, tk, vmem_limit


# ---------------------------------------------------------------------------
# pallas_call wrapper: out = (x [op y_row]) @ w, tiled over (N_out, M, K)
# ---------------------------------------------------------------------------
def fused_matmul(x, w, *, y_row=None, mode="add", out_dtype=jnp.float32):
    """x: [M, K] bf16 (K % 128 == 0); w: [K, Nout] bf16 (Nout % 128 == 0);
    y_row: optional [1, K] bf16 row composed with x (mode) before the matmul."""
    M, K = x.shape
    Nout = w.shape[1]
    vmem_cap = _vmem_capacity_bytes()
    cores = _num_tensorcores()
    out_bytes = np.dtype(out_dtype).itemsize
    TM, TN, TK, vmem_limit = _select_tiles(
        M, K, Nout, has_y_row=y_row is not None,
        out_bytes=out_bytes, vmem_cap=vmem_cap, cores=cores)

    grid = (Nout // TN, pl.cdiv(M, TM), K // TK)   # (n_out, m, k); k last

    in_specs = [pl.BlockSpec((TM, TK), lambda j, i, k: (i, k))]
    args = [x]
    if y_row is not None:
        in_specs.append(pl.BlockSpec((1, TK), lambda j, i, k: (0, k)))
        args.append(y_row)
        kernel = _make_comp_matmul_kernel(mode)
    else:
        kernel = _matmul_kernel
    in_specs.append(pl.BlockSpec((TK, TN), lambda j, i, k: (k, j)))
    args.append(w)

    return pl.pallas_call(
        kernel,
        out_shape=jax.ShapeDtypeStruct((M, Nout), out_dtype),
        grid_spec=pltpu.PrefetchScalarGridSpec(
            num_scalar_prefetch=0,
            grid=grid,
            in_specs=in_specs,
            out_specs=pl.BlockSpec((TM, TN), lambda j, i, k: (i, j)),
            scratch_shapes=[pltpu.VMEM((TM, TN), jnp.float32)],
        ),
        compiler_params=pltpu.CompilerParams(
            dimension_semantics=("parallel", "parallel", "arbitrary"),
            vmem_limit_bytes=int(vmem_limit),
        ),
    )(*args)


# ---------------------------------------------------------------------------
# CompGCNLayer forward
# ---------------------------------------------------------------------------
def compgcn_forward(node_embed, rela_embed, edges, params, num_rela, mode="add"):
    """JAX/Pallas equivalent of CompGCNLayer.forward.

    edges: concrete numpy int array [E, 3] with columns (src, rela, des).
    """
    if mode not in ("add", "sub", "mult"):
        raise ValueError(f"unsupported composition mode: {mode}")

    node_embed = jnp.asarray(node_embed, jnp.float32)
    rela_embed = jnp.asarray(rela_embed, jnp.float32)
    edges = np.asarray(edges)

    N, D_in = node_embed.shape
    D_out = params["W_i"].shape[0]
    D_in_p = _round_up(D_in, _LANE)
    D_out_p = _round_up(D_out, _LANE)

    def prep_w(w):
        # PyTorch [out, in] -> [in, out], zero-padded to lane-dense dims, bf16.
        w_t = jnp.asarray(w, jnp.float32).T
        w_t = jnp.pad(w_t, ((0, D_in_p - D_in), (0, D_out_p - D_out)))
        return w_t.astype(jnp.bfloat16)

    W_i_t = prep_w(params["W_i"])
    W_o_t = prep_w(params["W_o"])
    W_s_t = prep_w(params["W_s"])
    W_r_t = prep_w(params["W_r"])

    def pad_feat(a):
        if D_in_p != D_in:
            a = jnp.pad(a, ((0, 0), (0, D_in_p - D_in)))
        return a.astype(jnp.bfloat16)   # cast once; kernels consume bf16 directly

    node_b = pad_feat(node_embed)       # [N, D_in_p] bf16
    rela_b = pad_feat(rela_embed)       # [R, D_in_p] bf16

    # ---- fused node-side projections: node @ [W_i | W_o | W_s] --------------
    node_ws = ([("i", W_i_t)] if mode != "mult" else []) + \
              [("o", W_o_t), ("s", W_s_t)]
    W_node = jnp.concatenate([w for _, w in node_ws], axis=1)
    node_proj = fused_matmul(node_b, W_node)                     # [N, k*D_out_p] f32
    nproj = {name: node_proj[:, pos * D_out_p: pos * D_out_p + D_out]
             for pos, (name, _) in enumerate(node_ws)}

    # ---- fused relation-side projections: rela @ [W_i | W_o | W_s | W_r] ----
    rela_ws = ([("i", W_i_t)] if mode != "mult" else []) + \
              [("o", W_o_t), ("s", W_s_t), ("r", W_r_t)]
    W_rela = jnp.concatenate([w for _, w in rela_ws], axis=1)
    rela_proj = fused_matmul(rela_b, W_rela)                     # [R, k*D_out_p] f32
    rproj = {name: rela_proj[:, pos * D_out_p: pos * D_out_p + D_out]
             for pos, (name, _) in enumerate(rela_ws)}

    # ---- self-loop term: h_v = W_i(comp(node, rela_self, mode)) -------------
    if mode == "mult":
        # No linearity for mult: fused composition+matmul kernel, relation row
        # broadcast in-VMEM (never materialized as [N, D_in] in HBM).
        self_row = rela_b[num_rela * 2][None, :]
        h_v = fused_matmul(node_b, W_i_t, y_row=self_row, mode="mult")[:, :D_out]
    else:
        sign = 1.0 if mode == "add" else -1.0
        h_v = nproj["i"] + sign * rproj["i"][num_rela * 2][None, :]

    # ---- edge message passing (inner composition is always 'add' in the ref)
    # W(node[src] + rela[rel]) == (node@W)[src] + (rela@W)[rel], so gathers run
    # on the already-projected [*, D_out] rows (no [E, D_in] HBM round trip).
    # TODO(synk): if a non-linear edge composition were required, fuse the row
    # gather + compose + matmul into a scalar-prefetch DMA-gather kernel.
    def process(mask, node_col, rela_col, h_v):
        sub = edges[np.asarray(mask)]
        E = int(sub.shape[0])
        if E == 0:
            return h_v
        src = jnp.asarray(sub[:, 0], jnp.int32)
        rel = jnp.asarray(sub[:, 1], jnp.int32)
        des_np = sub[:, 2].astype(np.int64)
        des = jnp.asarray(des_np, jnp.int32)

        msg = node_col[src] + rela_col[rel]                      # [E, D_out] f32
        # Reference quirk: index_matrix[des] = arange(E) (sequential, last write
        # wins), then message[index_matrix[des]] makes every edge targeting node
        # d carry the message of the LAST such edge.  Built in numpy so the
        # duplicate-index ordering is deterministic and matches PyTorch.
        idx_mat = np.zeros((N,), dtype=np.int64)
        idx_mat[des_np] = np.arange(E, dtype=np.int64)
        perm = jnp.asarray(idx_mat[des_np], jnp.int32)
        msg = msg[perm]
        # unique + scatter_add + assign in the reference == scatter-add at des.
        return h_v.at[des].add(msg)

    h_v = process(edges[:, 1] < num_rela, nproj["o"], rproj["o"], h_v)
    h_v = process(edges[:, 1] >= num_rela, nproj["s"], rproj["s"], h_v)

    # ---- relation transform: h_r = W_r(rela_embed) ---------------------------
    h_r = rproj["r"]

    return h_v, h_r


# ---------------------------------------------------------------------------
# Pure numpy reference (mirrors the PyTorch module, f32)
# ---------------------------------------------------------------------------
def _reference_forward(node_embed, rela_embed, edges, params, num_rela, mode):
    node = np.asarray(node_embed, np.float32)
    rela = np.asarray(rela_embed, np.float32)
    edges = np.asarray(edges)
    W = {k: np.asarray(v, np.float32) for k, v in params.items()}

    def comp(x, r, m):
        if m == "add":
            return x + r
        if m == "sub":
            return x - r
        return x * r

    h_v = comp(node, rela[num_rela * 2], mode) @ W["W_i"].T

    def block(h_v, mask, Wm):
        sub = edges[mask]
        if sub.shape[0] == 0:
            return h_v
        src, rl, des = sub[:, 0], sub[:, 1], sub[:, 2]
        idx = np.zeros(node.shape[0], dtype=np.int64)
        idx[des] = np.arange(sub.shape[0])
        msg = comp(node[src], rela[rl], "add") @ Wm.T
        msg = msg[idx[des]]
        uniq, inv = np.unique(des, return_inverse=True)
        agg = np.zeros((uniq.shape[0], msg.shape[1]), np.float32)
        np.add.at(agg, inv, msg)
        h_v = h_v.copy()
        h_v[uniq] = h_v[uniq] + agg
        return h_v

    h_v = block(h_v, edges[:, 1] < num_rela, W["W_o"])
    h_v = block(h_v, edges[:, 1] >= num_rela, W["W_s"])
    h_r = rela @ W["W_r"].T
    return h_v, h_r


if __name__ == "__main__":
    N, D_in, D_out, num_rela = 16, 32, 32, 4

    key = jax.random.PRNGKey(0)
    k1, k2, k3, k4, k5, k6 = jax.random.split(key, 6)
    node_embed = jax.random.normal(k1, (N, D_in), dtype=jnp.float32)
    rela_embed = jax.random.normal(k2, (2 * num_rela + 1, D_in),
                                   dtype=jnp.float32)
    # nn.Linear(input_dim, output_dim, bias=False) weights, PyTorch [out, in].
    params = {
        "W_o": 0.1 * jax.random.normal(k3, (D_out, D_in), dtype=jnp.float32),
        "W_i": 0.1 * jax.random.normal(k4, (D_out, D_in), dtype=jnp.float32),
        "W_s": 0.1 * jax.random.normal(k5, (D_out, D_in), dtype=jnp.float32),
        "W_r": 0.1 * jax.random.normal(k6, (D_out, D_in), dtype=jnp.float32),
    }

    # Deterministic edge list: half original relations, half reversed.
    rng = np.random.RandomState(0)
    E = 12
    src = rng.randint(0, N, size=E)
    des = rng.randint(0, N, size=E)
    rel = np.concatenate([
        rng.randint(0, num_rela, size=E // 2),
        rng.randint(num_rela, 2 * num_rela, size=E - E // 2),
    ])
    edges = np.stack([src, rel, des], axis=1).astype(np.int64)

    for mode in ("add", "mult"):
        h_v, h_r = compgcn_forward(node_embed, rela_embed, edges, params,
                                   num_rela, mode=mode)
        jax.block_until_ready((h_v, h_r))
        assert h_v.shape == (N, D_out)
        assert h_r.shape == (2 * num_rela + 1, D_out)
        hv_ref, hr_ref = _reference_forward(node_embed, rela_embed, edges,
                                            params, num_rela, mode)
        assert np.allclose(np.asarray(h_v), hv_ref, rtol=1e-1, atol=1e-1), \
            f"h_v mismatch (mode={mode})"
        assert np.allclose(np.asarray(h_r), hr_ref, rtol=1e-1, atol=1e-1), \
            f"h_r mismatch (mode={mode})"

    print("KERNEL_OK")
</pallas_src>

<mosaic_0001>
module attributes {stable_mosaic.version = 11 : i64} {
  func.func @_matmul_kernel(%arg0: i32, %arg1: i32, %arg2: i32, %arg3: memref<16x128xbf16, #tpu.memory_space<vmem>>, %arg4: memref<128x384xbf16, #tpu.memory_space<vmem>>, %arg5: memref<16x384xf32, #tpu.memory_space<vmem>>, %arg6: memref<16x384xf32, #tpu.memory_space<vmem>>) attributes {dimension_semantics = [#tpu.dimension_semantics<parallel>, #tpu.dimension_semantics<parallel>, #tpu.dimension_semantics<arbitrary>], iteration_bounds = array<i64: 1, 1, 1>, scalar_prefetch = 0 : i64, scratch_operands = 1 : i64, tpu.core_type = #tpu.core_type<tc>, window_params = [{transform_indices = @transform_0, window_bounds = array<i64: 16, 128>}, {transform_indices = @transform_1, window_bounds = array<i64: 128, 384>}, {transform_indices = @transform_2, window_bounds = array<i64: 16, 384>}]} {
    %c0_i32 = arith.constant 0 : i32
    %0 = arith.cmpi eq, %arg2, %c0_i32 : i32
    %1 = arith.extui %0 : i1 to i32
    %c0_i32_0 = arith.constant 0 : i32
    %2 = arith.cmpi ne, %1, %c0_i32_0 : i32
    scf.if %2 {
      %cst_10 = arith.constant 0.000000e+00 : f32
      %12 = vector.broadcast %cst_10 : f32 to vector<16x384xf32>
      %c0_11 = arith.constant 0 : index
      %c0_12 = arith.constant 0 : index
      %13 = vector.load %arg6[%c0_11, %c0_12] : memref<16x384xf32, #tpu.memory_space<vmem>>, vector<16x384xf32>
      tpu.vector_store %arg6[%c0_11, %c0_12], %12 {strides = array<i32>} : memref<16x384xf32, #tpu.memory_space<vmem>>, vector<16x384xf32>,
    } else {
    }
    %c0 = arith.constant 0 : index
    %c0_1 = arith.constant 0 : index
    %3 = vector.load %arg6[%c0, %c0_1] : memref<16x384xf32, #tpu.memory_space<vmem>>, vector<16x384xf32>
    %c0_2 = arith.constant 0 : index
    %c0_3 = arith.constant 0 : index
    %4 = vector.load %arg3[%c0_2, %c0_3] : memref<16x128xbf16, #tpu.memory_space<vmem>>, vector<16x128xbf16>
    %c0_4 = arith.constant 0 : index
    %c0_5 = arith.constant 0 : index
    %5 = vector.load %arg4[%c0_4, %c0_5] : memref<128x384xbf16, #tpu.memory_space<vmem>>, vector<128x384xbf16>
    %cst = arith.constant dense<0.000000e+00> : vector<16x384xf32>
    %6 = tpu.matmul %4, %5, %cst {dimension_numbers = #tpu.dot_dimension_numbers<[1], [0], [0], [1], [0, 0, 1, 1], [], []>} : vector<16x128xbf16>, vector<128x384xbf16>, vector<16x384xf32> -> vector<16x384xf32>
    %7 = arith.addf %3, %6 : vector<16x384xf32>
    %c0_6 = arith.constant 0 : index
    %c0_7 = arith.constant 0 : index
    %8 = vector.load %arg6[%c0_6, %c0_7] : memref<16x384xf32, #tpu.memory_space<vmem>>, vector<16x384xf32>
    tpu.vector_store %arg6[%c0_6, %c0_7], %7 {strides = array<i32>} : memref<16x384xf32, #tpu.memory_space<vmem>>, vector<16x384xf32>,
    %c0_i32_8 = arith.constant 0 : i32
    %9 = arith.cmpi eq, %arg2, %c0_i32_8 : i32
    %10 = arith.extui %9 : i1 to i32
    %c0_i32_9 = arith.constant 0 : i32
    %11 = arith.cmpi ne, %10, %c0_i32_9 : i32
    scf.if %11 {
      %c0_10 = arith.constant 0 : index
      %c0_11 = arith.constant 0 : index
      %12 = vector.load %arg6[%c0_10, %c0_11] : memref<16x384xf32, #tpu.memory_space<vmem>>, vector<16x384xf32>
      %c0_12 = arith.constant 0 : index
      %c0_13 = arith.constant 0 : index
      %13 = vector.load %arg5[%c0_12, %c0_13] : memref<16x384xf32, #tpu.memory_space<vmem>>, vector<16x384xf32>
      tpu.vector_store %arg5[%c0_12, %c0_13], %12 {strides = array<i32>} : memref<16x384xf32, #tpu.memory_space<vmem>>, vector<16x384xf32>,
    } else {
    }
    return
  }
  func.func @transform_0(%arg0: i32, %arg1: i32, %arg2: i32) -> (i32, i32) {
    %c0_i32 = arith.constant 0 : i32
    return %arg1, %arg2 : i32, i32
  }
  func.func @transform_1(%arg0: i32, %arg1: i32, %arg2: i32) -> (i32, i32) {
    %c0_i32 = arith.constant 0 : i32
    return %arg2, %arg0 : i32, i32
  }
  func.func @transform_2(%arg0: i32, %arg1: i32, %arg2: i32) -> (i32, i32) {
    %c0_i32 = arith.constant 0 : i32
    return %arg1, %arg0 : i32, i32
  }
}

</mosaic_0001>

<llo_original>
// kernel: tpu_custom_call.1
$region0: #{tpu_custom_call.1}
  #allocation0 [shape = 'u32[]', space=smem, size = 0x4, offset = 0x4, fixed_abs, tag = 'smem constant byte address 0x4 - core index']
  #allocation1 [shape = 'u32[72,128]{1,0:T(1,128)}', space=vmem, size = 0x9000, scoped, tag = 'internal scratch']
  #allocation2 [shape = 'f32[16,384]{1,0:T(8,128)}', space=vmem, size = 0x6000, scoped, tag = 'scratch operand']
  %s0 = inlined_call_operand.hbm [shape: bf16[16,128], index: 0, kind: input, shape index: {}]
  %s1 = inlined_call_operand.hbm [shape: bf16[128,384], index: 1, kind: input, shape index: {}]
  %s2 = inlined_call_operand.hbm [shape: f32[16,384], index: 2, kind: output, shape index: {}]
  %s3 = sld [smem:[#allocation0]]
  $region34: #{tpu_custom_call.1} parent=0
    _
  %s5 = ssub.s32 1, %s3
  %s6 = scalar_select 0, %s5, %s3
  $region1: #{tpu_custom_call.1} parent=0
    #allocation3 [shape = 'u8[4096]{0}', space=vmem, size = 0x1000, scoped, tag = 'input window, operand 0, single buffered']
    #allocation4 [shape = 's32[1]{0}', space=sflag, size = 0x4, scoped, tag = 'scoped memory for tpu_custom_call.1']
    #allocation5 [shape = 's32[1]{0}', space=sflag, size = 0x4, scoped, tag = 'scoped memory for tpu_custom_call.1']
    #allocation6 [shape = 'u8[98304]{0}', space=vmem, size = 0x18000, scoped, tag = 'input window, operand 1, single buffered']
    #allocation7 [shape = 's32[1]{0}', space=sflag, size = 0x4, scoped, tag = 'scoped memory for tpu_custom_call.1']
    #allocation8 [shape = 'u8[24576]{0}', space=vmem, size = 0x6000, scoped, tag = 'output window, operand 0, single buffered']
    %7 = vsyncpa [#allocation4], 0
    %8 = vsyncpa [#allocation7], 0
    %9 = vsyncpa [#allocation5], 0
    // Predicated region
    $region2: #{tpu_custom_call.1} parent=1 // pred_check
      _
    $region3: #{tpu_custom_call.1} parent=1 // pred_check_branch
      %11 = sbr.rel (0) target = $region5
    $region4: #{tpu_custom_call.1} parent=1 // pred_region
      %13 = vsyncadd [#allocation4], 0
      %s14 = sshll.u32 %s0, 4
      %s15 = int_to_ptr.hbm [resolvable:$true] %s14
      %s16 = sshll.u32 [#allocation3], 4
      %s17 = int_to_ptr.vmem [resolvable:$true] %s16
      %22 = dma.hbm_to_vmem [thread:$0]  %s15, 128, %s17, [#allocation4], 64, 64, 4
    $region5: #{tpu_custom_call.1} parent=1 // pred_fallthru
      _
    // Predicated region
    $region6: #{tpu_custom_call.1} parent=1 // pred_check
      _
    $region7: #{tpu_custom_call.1} parent=1 // pred_check_branch
      %24 = sbr.rel (0) target = $region9
    $region8: #{tpu_custom_call.1} parent=1 // pred_region
      %26 = vsyncadd [#allocation7], 0
      %s27 = sshll.u32 %s1, 4
      %s28 = int_to_ptr.hbm [resolvable:$true] %s27
      %s29 = sshll.u32 [#allocation6], 4
      %s30 = int_to_ptr.vmem [resolvable:$true] %s29
      %35 = dma.hbm_to_vmem [thread:$0]  %s28, 3072, %s30, [#allocation7], 192, 192, 12
    $region9: #{tpu_custom_call.1} parent=1 // pred_fallthru
      _
    // Predicated region
    $region10: #{tpu_custom_call.1} parent=1 // pred_check
      _
    $region11: #{tpu_custom_call.1} parent=1 // pred_check_branch
      %37 = sbr.rel (0) target = $region13
    $region12: #{tpu_custom_call.1} parent=1 // pred_region
      %39 = dma.done [#allocation4], 128
    $region13: #{tpu_custom_call.1} parent=1 // pred_fallthru
      _
    // Predicated region
    $region14: #{tpu_custom_call.1} parent=1 // pred_check
      _
    $region15: #{tpu_custom_call.1} parent=1 // pred_check_branch
      %41 = sbr.rel (0) target = $region17
    $region16: #{tpu_custom_call.1} parent=1 // pred_region
      %43 = dma.done [#allocation7], 3072
    $region17: #{tpu_custom_call.1} parent=1 // pred_fallthru
      _
    %p44 = scmp.eq.s32.totalorder 0, 0
    // Predicated region
    $region18: #{tpu_custom_call.1} parent=1 // pred_check
      %p45 = pneg %p44
    $region19: #{tpu_custom_call.1} parent=1 // pred_check_branch
      %47 = sbr.rel (%p45) target = $region21
    $region20: #{tpu_custom_call.1} parent=1 // pred_region
      %48 = vst [vmem:[#allocation2] sm:$0xff] 0.0
      %49 = vst [vmem:[#allocation2 + $0x8] sm:$0xff] 0.0
      %50 = vst [vmem:[#allocation2 + $0x10] sm:$0xff] 0.0
      %51 = vst [vmem:[#allocation2 + $0x18] sm:$0xff] 0.0
      %52 = vst [vmem:[#allocation2 + $0x20] sm:$0xff] 0.0
      %53 = vst [vmem:[#allocation2 + $0x28] sm:$0xff] 0.0
    $region21: #{tpu_custom_call.1} parent=1 // pred_fallthru
      _
    %v54 = vld [vmem:[#allocation2] sm:$0xff]
    %v55 = vld [vmem:[#allocation2 + $0x8] sm:$0xff]
    %v56 = vld [vmem:[#allocation2 + $0x10] sm:$0xff]
    %v57 = vld [vmem:[#allocation2 + $0x18] sm:$0xff]
    %v58 = vld [vmem:[#allocation2 + $0x20] sm:$0xff]
    %v59 = vld [vmem:[#allocation2 + $0x28] sm:$0xff]
    %v60 = vld [vmem:[#allocation3] sm:$0xf]
    %v61 = vld [vmem:[#allocation3 + $0x4] sm:$0xf]
    %v62 = vld [vmem:[#allocation6] sm:$0xff]
    %v63 = vld [vmem:[#allocation6 + $0x8] sm:$0xf]
    %v64 = vld [vmem:[#allocation6 + $0xc] sm:$0xff]
    %v65 = vld [vmem:[#allocation6 + $0x14] sm:$0xf]
    %v66 = vld [vmem:[#allocation6 + $0x18] sm:$0xff]
    %v67 = vld [vmem:[#allocation6 + $0x20] sm:$0xf]
    %v68 = vld [vmem:[#allocation6 + $0x24] sm:$0xff]
    %v69 = vld [vmem:[#allocation6 + $0x2c] sm:$0xf]
    %v70 = vld [vmem:[#allocation6 + $0x30] sm:$0xff]
    %v71 = vld [vmem:[#allocation6 + $0x38] sm:$0xf]
    %v72 = vld [vmem:[#allocation6 + $0x3c] sm:$0xff]
    %v73 = vld [vmem:[#allocation6 + $0x44] sm:$0xf]
    %v74 = vld [vmem:[#allocation6 + $0x48] sm:$0xff]
    %v75 = vld [vmem:[#allocation6 + $0x50] sm:$0xf]
    %v76 = vld [vmem:[#allocation6 + $0x54] sm:$0xff]
    %v77 = vld [vmem:[#allocation6 + $0x5c] sm:$0xf]
    %v78 = vld [vmem:[#allocation6 + $0x60] sm:$0xff]
    %v79 = vld [vmem:[#allocation6 + $0x68] sm:$0xf]
    %v80 = vld [vmem:[#allocation6 + $0x6c] sm:$0xff]
    %v81 = vld [vmem:[#allocation6 + $0x74] sm:$0xf]
    %v82 = vld [vmem:[#allocation6 + $0x78] sm:$0xff]
    %v83 = vld [vmem:[#allocation6 + $0x80] sm:$0xf]
    %v84 = vld [vmem:[#allocation6 + $0x84] sm:$0xff]
    %v85 = vld [vmem:[#allocation6 + $0x8c] sm:$0xf]
    %v86 = vld [vmem:[#allocation6 + $0x90] sm:$0xff]
    %v87 = vld [vmem:[#allocation6 + $0x98] sm:$0xf]
    %v88 = vld [vmem:[#allocation6 + $0x9c] sm:$0xff]
    %v89 = vld [vmem:[#allocation6 + $0xa4] sm:$0xf]
    %v90 = vld [vmem:[#allocation6 + $0xa8] sm:$0xff]
    %v91 = vld [vmem:[#allocation6 + $0xb0] sm:$0xf]
    %v92 = vld [vmem:[#allocation6 + $0xb4] sm:$0xff]
    %v93 = vld [vmem:[#allocation6 + $0xbc] sm:$0xf]
    %v96 = vunpack.c.l.b16 %v60
    %v97 = vunpack.c.l.b16 %v61
    %v98 = vpack.c.b16 %v97, %v96
    %v132 = vunpack.c.l.b16 %v62
    %v133 = vunpack.c.h.b16 %v62
    %v134 = vunpack.c.l.b16 %v63
    %v135 = vunpack.c.l.b16 %v64
    %v136 = vunpack.c.h.b16 %v64
    %v137 = vunpack.c.l.b16 %v65
    %v138 = vunpack.c.l.b16 %v66
    %v139 = vunpack.c.h.b16 %v66
    %v140 = vunpack.c.l.b16 %v67
    %v141 = vunpack.c.l.b16 %v68
    %v142 = vunpack.c.h.b16 %v68
    %v143 = vunpack.c.l.b16 %v69
    %v144 = vunpack.c.l.b16 %v70
    %v145 = vunpack.c.h.b16 %v70
    %v146 = vunpack.c.l.b16 %v71
    %v147 = vunpack.c.l.b16 %v72
    %v148 = vunpack.c.h.b16 %v72
    %v149 = vunpack.c.l.b16 %v73
    %v150 = vunpack.c.l.b16 %v74
    %v151 = vunpack.c.h.b16 %v74
    %v152 = vunpack.c.l.b16 %v75
    %v153 = vunpack.c.l.b16 %v76
    %v154 = vunpack.c.h.b16 %v76
    %v155 = vunpack.c.l.b16 %v77
    %v156 = vunpack.c.l.b16 %v78
    %v157 = vunpack.c.h.b16 %v78
    %v158 = vunpack.c.l.b16 %v79
    %v159 = vunpack.c.l.b16 %v80
    %v160 = vunpack.c.h.b16 %v80
    %v161 = vunpack.c.l.b16 %v81
    %v162 = vunpack.c.l.b16 %v82
    %v163 = vunpack.c.h.b16 %v82
    %v164 = vunpack.c.l.b16 %v83
    %v165 = vunpack.c.l.b16 %v84
    %v166 = vunpack.c.h.b16 %v84
    %v167 = vunpack.c.l.b16 %v85
    %v168 = vunpack.c.l.b16 %v86
    %v169 = vunpack.c.h.b16 %v86
    %v170 = vunpack.c.l.b16 %v87
    %v171 = vunpack.c.l.b16 %v88
    %v172 = vunpack.c.h.b16 %v88
    %v173 = vunpack.c.l.b16 %v89
    %v174 = vunpack.c.l.b16 %v90
    %v175 = vunpack.c.h.b16 %v90
    %v176 = vunpack.c.l.b16 %v91
    %v177 = vunpack.c.l.b16 %v92
    %v178 = vunpack.c.h.b16 %v92
    %v179 = vunpack.c.l.b16 %v93
    %v180 = vpack.c.b16 %v135, %v132
    %v181 = vpack.c.b16 %v136, %v133
    %v182 = vpack.c.b16 %v137, %v134
    %v183 = vpack.c.b16 %v141, %v138
    %v184 = vpack.c.b16 %v142, %v139
    %v185 = vpack.c.b16 %v143, %v140
    %v186 = vpack.c.b16 %v147, %v144
    %v187 = vpack.c.b16 %v148, %v145
    %v188 = vpack.c.b16 %v149, %v146
    %v189 = vpack.c.b16 %v153, %v150
    %v190 = vpack.c.b16 %v154, %v151
    %v191 = vpack.c.b16 %v155, %v152
    %v192 = vpack.c.b16 %v159, %v156
    %v193 = vpack.c.b16 %v160, %v157
    %v194 = vpack.c.b16 %v161, %v158
    %v195 = vpack.c.b16 %v165, %v162
    %v196 = vpack.c.b16 %v166, %v163
    %v197 = vpack.c.b16 %v167, %v164
    %v198 = vpack.c.b16 %v171, %v168
    %v199 = vpack.c.b16 %v172, %v169
    %v200 = vpack.c.b16 %v173, %v170
    %v201 = vpack.c.b16 %v177, %v174
    %v202 = vpack.c.b16 %v178, %v175
    %v203 = vpack.c.b16 %v179, %v176
    %228 = vmatpush.bf16.msra.mxu0 %v201
    %229 = vmatpush.bf16.msra.mxu0 %v198
    %230 = vmatpush.bf16.msra.mxu0 %v195
    %231 = vmatpush.bf16.msra.mxu0 %v192
    %232 = vmatpush.bf16.msra.mxu0 %v189
    %233 = vmatpush.bf16.msra.mxu0 %v186
    %234 = vmatpush.bf16.msra.mxu0 %v183
    %235 = vmatpush.bf16.msra.mxu0 %v180
    %236 = vmatmul.bf16.gmra.mxu0 %v98
    %v237 = vpop.f32.mrf.mxu0
    %v238 = vadd.f32 0.0, %v237
    %v239 = vpop.f32.mrf.mxu0
    %v240 = vadd.f32 0.0, %v239
    %241 = vdwg.mxu0
    %242 = vmatpush.bf16.msra.mxu0 %v202
    %243 = vmatpush.bf16.msra.mxu0 %v199
    %244 = vmatpush.bf16.msra.mxu0 %v196
    %245 = vmatpush.bf16.msra.mxu0 %v193
    %246 = vmatpush.bf16.msra.mxu0 %v190
    %247 = vmatpush.bf16.msra.mxu0 %v187
    %248 = vmatpush.bf16.msra.mxu0 %v184
    %249 = vmatpush.bf16.msra.mxu0 %v181
    %250 = vmatmul.bf16.gmra.mxu0 %v98
    %v251 = vpop.f32.mrf.mxu0
    %v252 = vadd.f32 0.0, %v251
    %v253 = vpop.f32.mrf.mxu0
    %v254 = vadd.f32 0.0, %v253
    %255 = vdwg.mxu0
    %256 = vmatpush.bf16.msra.mxu0 %v203
    %257 = vmatpush.bf16.msra.mxu0 %v200
    %258 = vmatpush.bf16.msra.mxu0 %v197
    %259 = vmatpush.bf16.msra.mxu0 %v194
    %260 = vmatpush.bf16.msra.mxu0 %v191
    %261 = vmatpush.bf16.msra.mxu0 %v188
    %262 = vmatpush.bf16.msra.mxu0 %v185
    %263 = vmatpush.bf16.msra.mxu0 %v182
    %264 = vmatmul.bf16.gmra.mxu0 %v98
    %v265 = vpop.f32.mrf.mxu0
    %v266 = vadd.f32 0.0, %v265
    %v267 = vpop.f32.mrf.mxu0
    %v268 = vadd.f32 0.0, %v267
    %269 = vdwg.mxu0
    %v270 = vadd.f32 %v54, %v238
    %v271 = vadd.f32 %v55, %v252
    %v272 = vadd.f32 %v56, %v266
    %v273 = vadd.f32 %v57, %v240
    %v274 = vadd.f32 %v58, %v254
    %v275 = vadd.f32 %v59, %v268
    %276 = vst [vmem:[#allocation2] sm:$0xff] %v270
    %277 = vst [vmem:[#allocation2 + $0x8] sm:$0xff] %v271
    %278 = vst [vmem:[#allocation2 + $0x10] sm:$0xff] %v272
    %279 = vst [vmem:[#allocation2 + $0x18] sm:$0xff] %v273
    %280 = vst [vmem:[#allocation2 + $0x20] sm:$0xff] %v274
    %281 = vst [vmem:[#allocation2 + $0x28] sm:$0xff] %v275
    // Predicated region
    $region22: #{tpu_custom_call.1} parent=1 // pred_check
      %p282 = pneg %p44
    $region23: #{tpu_custom_call.1} parent=1 // pred_check_branch
      %284 = sbr.rel (%p282) target = $region25
    $region24: #{tpu_custom_call.1} parent=1 // pred_region
      %v285 = vld [vmem:[#allocation2] sm:$0xff]
      %v286 = vld [vmem:[#allocation2 + $0x8] sm:$0xff]
      %v287 = vld [vmem:[#allocation2 + $0x10] sm:$0xff]
      %v288 = vld [vmem:[#allocation2 + $0x18] sm:$0xff]
      %v289 = vld [vmem:[#allocation2 + $0x20] sm:$0xff]
      %v290 = vld [vmem:[#allocation2 + $0x28] sm:$0xff]
      %291 = vst [vmem:[#allocation8] sm:$0xff] %v285
      %292 = vst [vmem:[#allocation8 + $0x8] sm:$0xff] %v286
      %293 = vst [vmem:[#allocation8 + $0x10] sm:$0xff] %v287
      %294 = vst [vmem:[#allocation8 + $0x18] sm:$0xff] %v288
      %295 = vst [vmem:[#allocation8 + $0x20] sm:$0xff] %v289
      %296 = vst [vmem:[#allocation8 + $0x28] sm:$0xff] %v290
    $region25: #{tpu_custom_call.1} parent=1 // pred_fallthru
      _
    // Predicated region
    $region26: #{tpu_custom_call.1} parent=1 // pred_check
      _
    $region27: #{tpu_custom_call.1} parent=1 // pred_check_branch
      %298 = sbr.rel (0) target = $region29
    $region28: #{tpu_custom_call.1} parent=1 // pred_region
      %300 = vsyncadd [#allocation5], 0
      %s301 = sshll.u32 [#allocation8], 4
      %s302 = int_to_ptr.vmem [resolvable:$true] %s301
      %s303 = sshll.u32 %s2, 4
      %s304 = int_to_ptr.hbm [resolvable:$true] %s303
      %309 = dma.vmem_to_hbm [thread:$0]  %s302, 768, %s304, [#allocation5], 384, 384, 24
    $region29: #{tpu_custom_call.1} parent=1 // pred_fallthru
      _
    // Predicated region
    $region30: #{tpu_custom_call.1} parent=1 // pred_check
      _
    $region31: #{tpu_custom_call.1} parent=1 // pred_check_branch
      %311 = sbr.rel (0) target = $region33
    $region32: #{tpu_custom_call.1} parent=1 // pred_region
      %313 = dma.done [#allocation5], 768
    $region33: #{tpu_custom_call.1} parent=1 // pred_fallthru
      _
    %314 = vsyncpa [#allocation4], 1
    %315 = vsyncpa [#allocation7], 1
    %316 = vsyncpa [#allocation5], 1

</llo_original>
